<compile_context>
chip_gen: v6e
topology: v6e:2x2x1
jax: 0.10.0
libtpu: 0.0.40
codegen_flags: <defaults>
</compile_context>

<pallas_src>
import functools
import math

import jax
import jax.numpy as jnp
from jax import lax
from jax.experimental import pallas as pl
from jax.experimental.pallas import tpu as pltpu

POS_MARGIN = 0.0      # ContrastiveLoss default
NEG_MARGIN = 1.0      # ContrastiveLoss default
_NORM_EPS = 1e-12     # F.normalize clamps the norm itself at eps

# On unit vectors d^2 = 2 - 2*gram, so the margin tests become gram thresholds.
_POS_GRAM_THRESH = 1.0 - 0.5 * POS_MARGIN * POS_MARGIN   # dist > pos_m  <=>  gram < this
_NEG_GRAM_THRESH = 1.0 - 0.5 * NEG_MARGIN * NEG_MARGIN   # dist < neg_m  <=>  gram > this


def _round_up(x, m):
    return ((x + m - 1) // m) * m


def _contrastive_tile_kernel(rows_ref, cols_ref, lab_i_ref, lab_j_ref, part_ref,
                             *, n_valid):
    """One (tm, tn) tile of the pairwise ContrastiveLoss.

    rows_ref : (tm, D)   pre-normalized embeddings, i-block
    cols_ref : (tn, D)   pre-normalized embeddings, j-block
    lab_i_ref: (tm, 1)   labels of the i-block
    lab_j_ref: (1, tn)   labels of the j-block
    part_ref : (1,1,128) lane-dense per-i-block partials, accumulated over j:
               [pos_dist_sum, pos_cnt, neg_dist_sum, neg_cnt, 0, ...]
    """
    tm = rows_ref.shape[0]
    tn = cols_ref.shape[0]
    i = pl.program_id(0)
    j = pl.program_id(1)

    @pl.when(j == 0)
    def _():
        part_ref[...] = jnp.zeros_like(part_ref)

    # Gram straight on the MXU, contracting the embedding dim of both operands
    # (no materialized transpose). Inputs are already unit-norm.
    gram = lax.dot_general(rows_ref[...], cols_ref[...],
                           (((1,), (1,)), ((), ())),
                           preferred_element_type=jnp.float32)       # (tm, tn)

    # Narrow index vectors only — no full-tile int32 iota materialization.
    row_gid = lax.broadcasted_iota(jnp.int32, (tm, 1), 0) + i * tm
    col_gid = lax.broadcasted_iota(jnp.int32, (1, tn), 1) + j * tn
    pair_valid = jnp.logical_and(row_gid < n_valid, col_gid < n_valid)
    not_eye = row_gid != col_gid
    same = lab_i_ref[...] == lab_j_ref[...]                           # (tm, tn)

    # Active-pair tests on gram (ReLU + AvgNonZeroReducer ">0" folded into one
    # compare each), independent of the EUP sqrt below.
    pos_active = same & not_eye & (gram < _POS_GRAM_THRESH) & pair_valid
    neg_active = (~same) & (gram > _NEG_GRAM_THRESH) & pair_valid

    # Unit vectors  =>  ||a - b||^2 = 2 - 2 <a, b>, clamped for safety.
    dist = jnp.sqrt(jnp.maximum(2.0 - 2.0 * gram, 0.0))

    # Two-stage reductions: sublane axis first (VALU adds), then one small
    # cross-lane reduce per quantity.
    def _sum2(x):
        return jnp.sum(jnp.sum(x, axis=0, keepdims=True))

    pos_dsum = _sum2(jnp.where(pos_active, dist, 0.0))
    neg_dsum = _sum2(jnp.where(neg_active, dist, 0.0))
    pos_cnt = _sum2(pos_active.astype(jnp.float32))
    neg_cnt = _sum2(neg_active.astype(jnp.float32))

    lane = lax.broadcasted_iota(jnp.int32, (1, 1, 128), 2)
    part_ref[...] += (jnp.where(lane == 0, pos_dsum, 0.0)
                      + jnp.where(lane == 1, pos_cnt, 0.0)
                      + jnp.where(lane == 2, neg_dsum, 0.0)
                      + jnp.where(lane == 3, neg_cnt, 0.0))


def loss_wrapper_forward(embeddings, labels, *, row_block=256, col_block=512):
    """forward(embeddings [N, D] float, labels [N] int) -> scalar loss."""
    n, d = embeddings.shape

    # L2-normalize ONCE here (LpDistance(normalize_embeddings=True) semantics,
    # matching F.normalize's norm clamp at eps) instead of per grid step.
    x = embeddings.astype(jnp.float32)
    norm = jnp.sqrt(jnp.sum(x * x, axis=-1, keepdims=True))
    x = x / jnp.maximum(norm, _NORM_EPS)

    # Tile selection: single tile for small N; otherwise 256-row x 512-col
    # tiles (bounded VMEM on v5e/v7x, >=2 i-blocks for v7x megacore at big N).
    n8 = _round_up(n, 8)
    if n8 <= col_block:
        tm = tn = n_pad = n8
    else:
        tm, tn = row_block, col_block
        n_pad = _round_up(n, math.lcm(tm, tn))
    num_i = n_pad // tm
    num_j = n_pad // tn

    lab = labels.astype(jnp.int32)
    if n_pad != n:
        x = jnp.pad(x, ((0, n_pad - n), (0, 0)))       # padded rows are zero
        lab = jnp.pad(lab, (0, n_pad - n))              # value irrelevant: index mask
    lab_i = lab.reshape(n_pad, 1)
    lab_j = lab.reshape(1, n_pad)

    kernel = functools.partial(_contrastive_tile_kernel, n_valid=n)

    partials = pl.pallas_call(
        kernel,
        out_shape=jax.ShapeDtypeStruct((num_i, 1, 128), jnp.float32),
        grid=(num_i, num_j),
        in_specs=[
            pl.BlockSpec((tm, d), lambda i, j: (i, 0)),     # i-block rows
            pl.BlockSpec((tn, d), lambda i, j: (j, 0)),     # j-block cols
            pl.BlockSpec((tm, 1), lambda i, j: (i, 0)),     # i-block labels
            pl.BlockSpec((1, tn), lambda i, j: (0, j)),     # j-block labels
        ],
        out_specs=pl.BlockSpec((1, 1, 128), lambda i, j: (i, 0, 0)),
        compiler_params=pltpu.CompilerParams(
            dimension_semantics=("parallel", "arbitrary")),
    )(x, x, lab_i, lab_j)

    totals = jnp.sum(partials, axis=(0, 1))                 # (128,)
    pos_dsum, pos_cnt = totals[0], totals[1]
    neg_dsum, neg_cnt = totals[2], totals[3]
    pos_loss_sum = pos_dsum - POS_MARGIN * pos_cnt          # sum(relu(d - m_pos))
    neg_loss_sum = NEG_MARGIN * neg_cnt - neg_dsum          # sum(relu(m_neg - d))
    pos_avg = pos_loss_sum / jnp.maximum(pos_cnt, 1.0)      # AvgNonZeroReducer
    neg_avg = neg_loss_sum / jnp.maximum(neg_cnt, 1.0)
    return pos_avg + neg_avg


def _reference_loss(embeddings, labels):
    """Pure-JAX reference for the same forward semantics."""
    x = embeddings.astype(jnp.float32)
    x = x / jnp.maximum(jnp.linalg.norm(x, axis=-1, keepdims=True), _NORM_EPS)
    dist = jnp.sqrt(jnp.maximum(2.0 - 2.0 * (x @ x.T), 0.0))
    same = labels[:, None] == labels[None, :]
    eye = jnp.eye(labels.shape[0], dtype=bool)
    pos_a = same & ~eye & (dist > POS_MARGIN)
    neg_a = ~same & (dist < NEG_MARGIN)
    pos_sum = jnp.where(pos_a, dist - POS_MARGIN, 0.0).sum()
    neg_sum = jnp.where(neg_a, NEG_MARGIN - dist, 0.0).sum()
    return (pos_sum / jnp.maximum(pos_a.sum(), 1)
            + neg_sum / jnp.maximum(neg_a.sum(), 1))


if __name__ == "__main__":
    # LossWrapper(loss_func=ContrastiveLoss(), embedding_size=128, miner=None, cbm_size=None)
    EMBEDDING_SIZE = 128
    BATCH = 32
    NUM_CLASSES = 4

    key = jax.random.PRNGKey(0)
    k_emb, k_lab = jax.random.split(key)
    embeddings = jax.random.normal(k_emb, (BATCH, EMBEDDING_SIZE), dtype=jnp.float32)
    labels = jax.random.randint(k_lab, (BATCH,), 0, NUM_CLASSES, dtype=jnp.int32)

    loss = loss_wrapper_forward(embeddings, labels)
    loss = jax.block_until_ready(loss)

    ref = _reference_loss(embeddings, labels)
    assert loss.shape == () and bool(jnp.isfinite(loss))
    assert bool(jnp.allclose(loss, ref, rtol=1e-4, atol=1e-4)), (loss, ref)
    print("KERNEL_OK")
</pallas_src>

<mosaic_0001>
module attributes {stable_mosaic.version = 11 : i64} {
  func.func @_contrastive_tile_kernel(%arg0: i32, %arg1: i32, %arg2: memref<32x128xf32, #tpu.memory_space<vmem>>, %arg3: memref<32x128xf32, #tpu.memory_space<vmem>>, %arg4: memref<32x1xi32, #tpu.memory_space<vmem>>, %arg5: memref<1x32xi32, #tpu.memory_space<vmem>>, %arg6: memref<1x1x128xf32, #tpu.memory_space<vmem>>) attributes {dimension_semantics = [#tpu.dimension_semantics<parallel>, #tpu.dimension_semantics<arbitrary>], iteration_bounds = array<i64: 1, 1>, scalar_prefetch = 0 : i64, scratch_operands = 0 : i64, tpu.core_type = #tpu.core_type<tc>, window_params = [{transform_indices = @transform_0, window_bounds = array<i64: 32, 128>}, {transform_indices = @transform_1, window_bounds = array<i64: 32, 128>}, {transform_indices = @transform_2, window_bounds = array<i64: 32, 1>}, {transform_indices = @transform_3, window_bounds = array<i64: 1, 32>}, {transform_indices = @transform_4, window_bounds = array<i64: 1, 1, 128>}]} {
    %c0_i32 = arith.constant 0 : i32
    %0 = arith.cmpi eq, %arg1, %c0_i32 : i32
    %1 = arith.extui %0 : i1 to i32
    %c0_i32_0 = arith.constant 0 : i32
    %2 = arith.cmpi ne, %1, %c0_i32_0 : i32
    scf.if %2 {
      %cst_38 = arith.constant 0.000000e+00 : f32
      %105 = vector.broadcast %cst_38 : f32 to vector<1x1x128xf32>
      %c0_39 = arith.constant 0 : index
      %c0_40 = arith.constant 0 : index
      %c0_41 = arith.constant 0 : index
      %106 = vector.load %arg6[%c0_39, %c0_40, %c0_41] : memref<1x1x128xf32, #tpu.memory_space<vmem>>, vector<1x1x128xf32>
      tpu.vector_store %arg6[%c0_39, %c0_40, %c0_41], %105 {strides = array<i32>} : memref<1x1x128xf32, #tpu.memory_space<vmem>>, vector<1x1x128xf32>,
    } else {
    }
    %c0 = arith.constant 0 : index
    %c0_1 = arith.constant 0 : index
    %3 = vector.load %arg2[%c0, %c0_1] : memref<32x128xf32, #tpu.memory_space<vmem>>, vector<32x128xf32>
    %c0_2 = arith.constant 0 : index
    %c0_3 = arith.constant 0 : index
    %4 = vector.load %arg3[%c0_2, %c0_3] : memref<32x128xf32, #tpu.memory_space<vmem>>, vector<32x128xf32>
    %cst = arith.constant dense<0.000000e+00> : vector<32x32xf32>
    %5 = tpu.matmul %3, %4, %cst {dimension_numbers = #tpu.dot_dimension_numbers<[1], [1], [0], [0], [0, 0, 1, 0], [], []>} : vector<32x128xf32>, vector<32x128xf32>, vector<32x32xf32> -> vector<32x32xf32>
    %6 = tpu.iota {dimensions = array<i32: 0>} : vector<32x1xi32>
    %c32_i32 = arith.constant 32 : i32
    %7 = arith.muli %arg0, %c32_i32 : i32
    %8 = vector.broadcast %7 : i32 to vector<32x1xi32>
    %9 = arith.addi %6, %8 : vector<32x1xi32>
    %10 = tpu.iota {dimensions = array<i32: 1>} : vector<1x32xi32>
    %c32_i32_4 = arith.constant 32 : i32
    %11 = arith.muli %arg1, %c32_i32_4 : i32
    %12 = vector.broadcast %11 : i32 to vector<1x32xi32>
    %13 = arith.addi %10, %12 : vector<1x32xi32>
    %c32_i32_5 = arith.constant 32 : i32
    %14 = vector.broadcast %c32_i32_5 : i32 to vector<32x1xi32>
    %15 = arith.cmpi slt, %9, %14 : vector<32x1xi32>
    %c32_i32_6 = arith.constant 32 : i32
    %16 = vector.broadcast %c32_i32_6 : i32 to vector<1x32xi32>
    %17 = arith.cmpi slt, %13, %16 : vector<1x32xi32>
    %18 = vector.broadcast %15 : vector<32x1xi1> to vector<32x32xi1>
    %19 = vector.broadcast %17 : vector<1x32xi1> to vector<32x32xi1>
    %20 = arith.andi %18, %19 : vector<32x32xi1>
    %21 = vector.broadcast %9 : vector<32x1xi32> to vector<32x32xi32>
    %22 = vector.broadcast %13 : vector<1x32xi32> to vector<32x32xi32>
    %23 = arith.cmpi ne, %21, %22 : vector<32x32xi32>
    %c0_7 = arith.constant 0 : index
    %c0_8 = arith.constant 0 : index
    %24 = vector.load %arg4[%c0_7, %c0_8] : memref<32x1xi32, #tpu.memory_space<vmem>>, vector<32x1xi32>
    %c0_9 = arith.constant 0 : index
    %c0_10 = arith.constant 0 : index
    %25 = vector.load %arg5[%c0_9, %c0_10] : memref<1x32xi32, #tpu.memory_space<vmem>>, vector<1x32xi32>
    %26 = vector.broadcast %24 : vector<32x1xi32> to vector<32x32xi32>
    %27 = vector.broadcast %25 : vector<1x32xi32> to vector<32x32xi32>
    %28 = arith.cmpi eq, %26, %27 : vector<32x32xi32>
    %29 = arith.andi %28, %23 : vector<32x32xi1>
    %cst_11 = arith.constant 1.000000e+00 : f32
    %30 = vector.broadcast %cst_11 : f32 to vector<32x32xf32>
    %31 = arith.cmpf olt, %5, %30 : vector<32x32xf32>
    %32 = arith.andi %29, %31 : vector<32x32xi1>
    %33 = arith.andi %32, %20 : vector<32x32xi1>
    %cst_12 = arith.constant dense<true> : vector<32x32xi1>
    %34 = arith.xori %28, %cst_12 : vector<32x32xi1>
    %cst_13 = arith.constant 5.000000e-01 : f32
    %35 = vector.broadcast %cst_13 : f32 to vector<32x32xf32>
    %36 = arith.cmpf ogt, %5, %35 : vector<32x32xf32>
    %37 = arith.andi %34, %36 : vector<32x32xi1>
    %38 = arith.andi %37, %20 : vector<32x32xi1>
    %cst_14 = arith.constant 2.000000e+00 : f32
    %39 = vector.broadcast %cst_14 : f32 to vector<32x32xf32>
    %40 = arith.mulf %39, %5 : vector<32x32xf32>
    %cst_15 = arith.constant 2.000000e+00 : f32
    %41 = vector.broadcast %cst_15 : f32 to vector<32x32xf32>
    %42 = arith.subf %41, %40 : vector<32x32xf32>
    %cst_16 = arith.constant 0.000000e+00 : f32
    %43 = vector.broadcast %cst_16 : f32 to vector<32x32xf32>
    %44 = arith.maximumf %42, %43 : vector<32x32xf32>
    %45 = math.sqrt %44 : vector<32x32xf32>
    %cst_17 = arith.constant 0.000000e+00 : f32
    %46 = vector.broadcast %cst_17 : f32 to vector<32x32xf32>
    %47 = arith.select %33, %45, %46 : vector<32x32xi1>, vector<32x32xf32>
    %cst_18 = arith.constant dense<0.000000e+00> : vector<32xf32>
    %48 = vector.multi_reduction <add>, %47, %cst_18 [0] : vector<32x32xf32> to vector<32xf32>
    %49 = vector.shape_cast %48 : vector<32xf32> to vector<1x32xf32>
    %50 = vector.shape_cast %49 : vector<1x32xf32> to vector<1x1x32xf32>
    %cst_19 = arith.constant dense<0.000000e+00> : vector<1xf32>
    %51 = vector.multi_reduction <add>, %50, %cst_19 [1, 2] : vector<1x1x32xf32> to vector<1xf32>
    %52 = vector.shape_cast %51 : vector<1xf32> to vector<1x1x1xf32>
    %53 = vector.extract %52[0, 0, 0] : f32 from vector<1x1x1xf32>
    %cst_20 = arith.constant 0.000000e+00 : f32
    %54 = vector.broadcast %cst_20 : f32 to vector<32x32xf32>
    %55 = arith.select %38, %45, %54 : vector<32x32xi1>, vector<32x32xf32>
    %cst_21 = arith.constant dense<0.000000e+00> : vector<32xf32>
    %56 = vector.multi_reduction <add>, %55, %cst_21 [0] : vector<32x32xf32> to vector<32xf32>
    %57 = vector.shape_cast %56 : vector<32xf32> to vector<1x32xf32>
    %58 = vector.shape_cast %57 : vector<1x32xf32> to vector<1x1x32xf32>
    %cst_22 = arith.constant dense<0.000000e+00> : vector<1xf32>
    %59 = vector.multi_reduction <add>, %58, %cst_22 [1, 2] : vector<1x1x32xf32> to vector<1xf32>
    %60 = vector.shape_cast %59 : vector<1xf32> to vector<1x1x1xf32>
    %61 = vector.extract %60[0, 0, 0] : f32 from vector<1x1x1xf32>
    %62 = arith.extui %33 : vector<32x32xi1> to vector<32x32xi32>
    %63 = arith.sitofp %62 : vector<32x32xi32> to vector<32x32xf32>
    %cst_23 = arith.constant dense<0.000000e+00> : vector<32xf32>
    %64 = vector.multi_reduction <add>, %63, %cst_23 [0] : vector<32x32xf32> to vector<32xf32>
    %65 = vector.shape_cast %64 : vector<32xf32> to vector<1x32xf32>
    %66 = vector.shape_cast %65 : vector<1x32xf32> to vector<1x1x32xf32>
    %cst_24 = arith.constant dense<0.000000e+00> : vector<1xf32>
    %67 = vector.multi_reduction <add>, %66, %cst_24 [1, 2] : vector<1x1x32xf32> to vector<1xf32>
    %68 = vector.shape_cast %67 : vector<1xf32> to vector<1x1x1xf32>
    %69 = vector.extract %68[0, 0, 0] : f32 from vector<1x1x1xf32>
    %70 = arith.extui %38 : vector<32x32xi1> to vector<32x32xi32>
    %71 = arith.sitofp %70 : vector<32x32xi32> to vector<32x32xf32>
    %cst_25 = arith.constant dense<0.000000e+00> : vector<32xf32>
    %72 = vector.multi_reduction <add>, %71, %cst_25 [0] : vector<32x32xf32> to vector<32xf32>
    %73 = vector.shape_cast %72 : vector<32xf32> to vector<1x32xf32>
    %74 = vector.shape_cast %73 : vector<1x32xf32> to vector<1x1x32xf32>
    %cst_26 = arith.constant dense<0.000000e+00> : vector<1xf32>
    %75 = vector.multi_reduction <add>, %74, %cst_26 [1, 2] : vector<1x1x32xf32> to vector<1xf32>
    %76 = vector.shape_cast %75 : vector<1xf32> to vector<1x1x1xf32>
    %77 = vector.extract %76[0, 0, 0] : f32 from vector<1x1x1xf32>
    %78 = tpu.iota {dimensions = array<i32: 2>} : vector<1x1x128xi32>
    %c0_27 = arith.constant 0 : index
    %c0_28 = arith.constant 0 : index
    %c0_29 = arith.constant 0 : index
    %79 = vector.load %arg6[%c0_27, %c0_28, %c0_29] : memref<1x1x128xf32, #tpu.memory_space<vmem>>, vector<1x1x128xf32>
    %c0_i32_30 = arith.constant 0 : i32
    %80 = vector.broadcast %c0_i32_30 : i32 to vector<1x1x128xi32>
    %81 = arith.cmpi eq, %78, %80 : vector<1x1x128xi32>
    %cst_31 = arith.constant 0.000000e+00 : f32
    %82 = vector.broadcast %53 : f32 to vector<1x1x128xf32>
    %83 = vector.broadcast %cst_31 : f32 to vector<1x1x128xf32>
    %84 = arith.select %81, %82, %83 : vector<1x1x128xi1>, vector<1x1x128xf32>
    %c1_i32 = arith.constant 1 : i32
    %85 = vector.broadcast %c1_i32 : i32 to vector<1x1x128xi32>
    %86 = arith.cmpi eq, %78, %85 : vector<1x1x128xi32>
    %cst_32 = arith.constant 0.000000e+00 : f32
    %87 = vector.broadcast %69 : f32 to vector<1x1x128xf32>
    %88 = vector.broadcast %cst_32 : f32 to vector<1x1x128xf32>
    %89 = arith.select %86, %87, %88 : vector<1x1x128xi1>, vector<1x1x128xf32>
    %90 = arith.addf %84, %89 : vector<1x1x128xf32>
    %c2_i32 = arith.constant 2 : i32
    %91 = vector.broadcast %c2_i32 : i32 to vector<1x1x128xi32>
    %92 = arith.cmpi eq, %78, %91 : vector<1x1x128xi32>
    %cst_33 = arith.constant 0.000000e+00 : f32
    %93 = vector.broadcast %61 : f32 to vector<1x1x128xf32>
    %94 = vector.broadcast %cst_33 : f32 to vector<1x1x128xf32>
    %95 = arith.select %92, %93, %94 : vector<1x1x128xi1>, vector<1x1x128xf32>
    %96 = arith.addf %90, %95 : vector<1x1x128xf32>
    %c3_i32 = arith.constant 3 : i32
    %97 = vector.broadcast %c3_i32 : i32 to vector<1x1x128xi32>
    %98 = arith.cmpi eq, %78, %97 : vector<1x1x128xi32>
    %cst_34 = arith.constant 0.000000e+00 : f32
    %99 = vector.broadcast %77 : f32 to vector<1x1x128xf32>
    %100 = vector.broadcast %cst_34 : f32 to vector<1x1x128xf32>
    %101 = arith.select %98, %99, %100 : vector<1x1x128xi1>, vector<1x1x128xf32>
    %102 = arith.addf %96, %101 : vector<1x1x128xf32>
    %103 = arith.addf %79, %102 : vector<1x1x128xf32>
    %c0_35 = arith.constant 0 : index
    %c0_36 = arith.constant 0 : index
    %c0_37 = arith.constant 0 : index
    %104 = vector.load %arg6[%c0_35, %c0_36, %c0_37] : memref<1x1x128xf32, #tpu.memory_space<vmem>>, vector<1x1x128xf32>
    tpu.vector_store %arg6[%c0_35, %c0_36, %c0_37], %103 {strides = array<i32>} : memref<1x1x128xf32, #tpu.memory_space<vmem>>, vector<1x1x128xf32>,
    return
  }
  func.func @transform_0(%arg0: i32, %arg1: i32) -> (i32, i32) {
    %c0_i32 = arith.constant 0 : i32
    %c0_i32_0 = arith.constant 0 : i32
    return %arg0, %c0_i32 : i32, i32
  }
  func.func @transform_1(%arg0: i32, %arg1: i32) -> (i32, i32) {
    %c0_i32 = arith.constant 0 : i32
    %c0_i32_0 = arith.constant 0 : i32
    return %arg1, %c0_i32 : i32, i32
  }
  func.func @transform_2(%arg0: i32, %arg1: i32) -> (i32, i32) {
    %c0_i32 = arith.constant 0 : i32
    %c0_i32_0 = arith.constant 0 : i32
    return %arg0, %c0_i32 : i32, i32
  }
  func.func @transform_3(%arg0: i32, %arg1: i32) -> (i32, i32) {
    %c0_i32 = arith.constant 0 : i32
    %c0_i32_0 = arith.constant 0 : i32
    return %c0_i32, %arg1 : i32, i32
  }
  func.func @transform_4(%arg0: i32, %arg1: i32) -> (i32, i32, i32) {
    %c0_i32 = arith.constant 0 : i32
    %c0_i32_0 = arith.constant 0 : i32
    %c0_i32_1 = arith.constant 0 : i32
    return %arg0, %c0_i32, %c0_i32_0 : i32, i32, i32
  }
}

</mosaic_0001>

<llo_original>
// kernel: tpu_custom_call.1
$region0: #{tpu_custom_call.1}
  #allocation0 [shape = 'u32[]', space=smem, size = 0x4, offset = 0x4, fixed_abs, tag = 'smem constant byte address 0x4 - core index']
  #allocation1 [shape = 'u32[144,128]{1,0:T(1,128)}', space=vmem, size = 0x12000, scoped, tag = 'internal scratch']
  %s0 = inlined_call_operand.vmem [shape: f32[32,128], index: 0, kind: input, shape index: {}]
  %s1 = inlined_call_operand.hbm [shape: f32[32,128], index: 1, kind: input, shape index: {}]
  %s2 = inlined_call_operand.vmem [shape: s32[32,1], index: 2, kind: input, shape index: {}]
  %s3 = inlined_call_operand.vmem [shape: s32[1,32], index: 3, kind: input, shape index: {}]
  %s4 = inlined_call_operand.hbm [shape: f32[1,1,128], index: 4, kind: output, shape index: {}]
  %s5 = sld [smem:[#allocation0]]
  $region34: #{tpu_custom_call.1} parent=0
    _
  %s7 = ssub.s32 1, %s5
  %s8 = scalar_select 0, %s7, %s5
  $region1: #{tpu_custom_call.1} parent=0
    #allocation2 [shape = 'u8[16384]{0}', space=vmem, size = 0x4000, scoped, tag = 'input window, operand 1, single buffered']
    #allocation3 [shape = 's32[1]{0}', space=sflag, size = 0x4, scoped, tag = 'scoped memory for tpu_custom_call.1']
    #allocation4 [shape = 's32[1]{0}', space=sflag, size = 0x4, scoped, tag = 'scoped memory for tpu_custom_call.1']
    #allocation5 [shape = 'u8[512]{0}', space=vmem, size = 0x400, scoped, tag = 'output window, operand 0, single buffered']
    %9 = vsyncpa [#allocation3], 0
    %10 = vsyncpa [#allocation4], 0
    // Predicated region
    $region2: #{tpu_custom_call.1} parent=1 // pred_check
      _
    $region3: #{tpu_custom_call.1} parent=1 // pred_check_branch
      %12 = sbr.rel (0) target = $region5
    $region4: #{tpu_custom_call.1} parent=1 // pred_region
      _
    $region5: #{tpu_custom_call.1} parent=1 // pred_fallthru
      _
    // Predicated region
    $region6: #{tpu_custom_call.1} parent=1 // pred_check
      _
    $region7: #{tpu_custom_call.1} parent=1 // pred_check_branch
      %14 = sbr.rel (0) target = $region9
    $region8: #{tpu_custom_call.1} parent=1 // pred_region
      %s16 = ssub.s32 512, 512
      %17 = vsyncadd [#allocation3], %s16
      %s18 = sshll.u32 [#allocation2], 4
      %s19 = int_to_ptr.vmem [resolvable:$true] %s18
      %24 = dma.hbm_to_vmem [thread:$0]  %s1, 512, %s19, [#allocation3], 128, 128, 8
    $region9: #{tpu_custom_call.1} parent=1 // pred_fallthru
      _
    // Predicated region
    $region10: #{tpu_custom_call.1} parent=1 // pred_check
      _
    $region11: #{tpu_custom_call.1} parent=1 // pred_check_branch
      %26 = sbr.rel (0) target = $region13
    $region12: #{tpu_custom_call.1} parent=1 // pred_region
      _
    $region13: #{tpu_custom_call.1} parent=1 // pred_fallthru
      _
    // Predicated region
    $region14: #{tpu_custom_call.1} parent=1 // pred_check
      _
    $region15: #{tpu_custom_call.1} parent=1 // pred_check_branch
      %28 = sbr.rel (0) target = $region17
    $region16: #{tpu_custom_call.1} parent=1 // pred_region
      _
    $region17: #{tpu_custom_call.1} parent=1 // pred_fallthru
      _
    // Predicated region
    $region18: #{tpu_custom_call.1} parent=1 // pred_check
      _
    $region19: #{tpu_custom_call.1} parent=1 // pred_check_branch
      %30 = sbr.rel (0) target = $region21
    $region20: #{tpu_custom_call.1} parent=1 // pred_region
      %31 = dma.done [#allocation3], 512
    $region21: #{tpu_custom_call.1} parent=1 // pred_fallthru
      _
    %p32 = scmp.eq.s32.totalorder 0, 0
    // Predicated region
    $region22: #{tpu_custom_call.1} parent=1 // pred_check
      %p33 = pneg %p32
    $region23: #{tpu_custom_call.1} parent=1 // pred_check_branch
      %35 = sbr.rel (%p33) target = $region25
    $region24: #{tpu_custom_call.1} parent=1 // pred_region
      %36 = vst [vmem:[#allocation5] sm:$0x1] 0.0
    $region25: #{tpu_custom_call.1} parent=1 // pred_fallthru
      _
    %v37 = vld [vmem:[%s0] sm:$0xff]
    %v38 = vld [vmem:[%s0 + $0x8] sm:$0xff]
    %v39 = vld [vmem:[%s0 + $0x10] sm:$0xff]
    %v40 = vld [vmem:[%s0 + $0x18] sm:$0xff]
    %v41 = vld [vmem:[#allocation2] sm:$0xff]
    %v42 = vld [vmem:[#allocation2 + $0x8] sm:$0xff]
    %v43 = vld [vmem:[#allocation2 + $0x10] sm:$0xff]
    %v44 = vld [vmem:[#allocation2 + $0x18] sm:$0xff]
    %45 = vmatprep.subr.mxu0 0.0
    %46 = vmatpush1.xpose.msra.mxu0 0.0
    %47 = vmatprep.subr.mxu0 0.0
    %48 = vmatpush1.xpose.msra.mxu0 0.0
    %49 = vmatprep.subr.mxu0 0.0
    %50 = vmatpush1.xpose.msra.mxu0 0.0
    %51 = vmatprep.subr.mxu0 0.0
    %52 = vmatpush1.xpose.msra.mxu0 0.0
    %53 = vmatprep.subr.mxu0 0.0
    %54 = vmatpush1.xpose.msra.mxu0 0.0
    %55 = vmatprep.subr.mxu0 0.0
    %56 = vmatpush1.xpose.msra.mxu0 0.0
    %57 = vmatprep.subr.mxu0 0.0
    %58 = vmatpush1.xpose.msra.mxu0 0.0
    %59 = vmatprep.subr.mxu0 0.0
    %60 = vmatpush1.xpose.msra.mxu0 0.0
    %61 = vmatprep.subr.mxu0 0.0
    %62 = vmatpush1.xpose.msra.mxu0 0.0
    %63 = vmatprep.subr.mxu0 0.0
    %64 = vmatpush1.xpose.msra.mxu0 0.0
    %65 = vmatprep.subr.mxu0 0.0
    %66 = vmatpush1.xpose.msra.mxu0 0.0
    %67 = vmatprep.subr.mxu0 0.0
    %68 = vmatpush1.xpose.msra.mxu0 0.0
    %69 = vmatprep.subr.mxu0 0.0
    %70 = vmatpush1.xpose.msra.mxu0 %v44
    %71 = vmatprep.subr.mxu0 0.0
    %72 = vmatpush1.xpose.msra.mxu0 %v43
    %73 = vmatprep.subr.mxu0 0.0
    %74 = vmatpush1.xpose.msra.mxu0 %v42
    %75 = vmatprep.subr.mxu0 0.0
    %76 = vmatpush1.xpose.msra.mxu0 %v41
    %77 = vmatprep.subr.mxu0 0.0
    %78 = vmatpush2.xpose.msra.mxu0 0.0
    %79 = vmatprep.subr.mxu0 0.0
    %80 = vmatpush2.xpose.msra.mxu0 0.0
    %81 = vmatprep.subr.mxu0 0.0
    %82 = vmatpush2.xpose.msra.mxu0 0.0
    %83 = vmatprep.subr.mxu0 0.0
    %84 = vmatpush2.xpose.msra.mxu0 0.0
    %85 = vmatprep.subr.mxu0 0.0
    %86 = vmatpush2.xpose.msra.mxu0 0.0
    %87 = vmatprep.subr.mxu0 0.0
    %88 = vmatpush2.xpose.msra.mxu0 0.0
    %89 = vmatprep.subr.mxu0 0.0
    %90 = vmatpush2.xpose.msra.mxu0 0.0
    %91 = vmatprep.subr.mxu0 0.0
    %92 = vmatpush2.xpose.msra.mxu0 0.0
    %93 = vmatprep.subr.mxu0 0.0
    %94 = vmatpush2.xpose.msra.mxu0 0.0
    %95 = vmatprep.subr.mxu0 0.0
    %96 = vmatpush2.xpose.msra.mxu0 0.0
    %97 = vmatprep.subr.mxu0 0.0
    %98 = vmatpush2.xpose.msra.mxu0 0.0
    %99 = vmatprep.subr.mxu0 0.0
    %100 = vmatpush2.xpose.msra.mxu0 0.0
    %101 = vmatprep.subr.mxu0 0.0
    %102 = vmatpush2.xpose.msra.mxu0 0.0
    %103 = vmatprep.subr.mxu0 0.0
    %104 = vmatpush2.xpose.msra.mxu0 0.0
    %105 = vmatprep.subr.mxu0 0.0
    %106 = vmatpush2.xpose.msra.mxu0 0.0
    %107 = vmatprep.subr.mxu0 0.0
    %108 = vmatpush2.xpose.msra.mxu0 0.0
    %109 = vmatprep.mubr.f32.mxu0 0.0
    %110 = vmatmul.mubr.f32.gmra.mxu0 %v37
    %v111 = vpop.f32.mrf.mxu0
    %v112 = vadd.f32 0.0, %v111
    %v113 = vpop.f32.mrf.mxu0
    %114 = vmatprep.mubr.f32.mxu0 0.0
    %115 = vmatmul.mubr.f32.gmra.mxu0 %v38
    %v116 = vpop.f32.mrf.mxu0
    %v117 = vadd.f32 0.0, %v116
    %v118 = vpop.f32.mrf.mxu0
    %119 = vmatprep.mubr.f32.mxu0 0.0
    %120 = vmatmul.mubr.f32.gmra.mxu0 %v39
    %v121 = vpop.f32.mrf.mxu0
    %v122 = vadd.f32 0.0, %v121
    %v123 = vpop.f32.mrf.mxu0
    %124 = vmatprep.mubr.f32.mxu0 0.0
    %125 = vmatmul.mubr.f32.gmra.mxu0 %v40
    %v126 = vpop.f32.mrf.mxu0
    %v127 = vadd.f32 0.0, %v126
    %v128 = vpop.f32.mrf.mxu0
    %129 = vdwg.mxu0
    %v130 = vlaneseq
    %v131 = vshrl.u32 %v130, 7
    %v132 = vadd.s32 %v131, 8
    %v133 = vadd.s32 %v131, 16
    %v134 = vadd.s32 %v131, 24
    %s135 = smul.u32 0, 32
    %v136 = vstv %s135
    %v137 = vadd.s32 %v131, %v136
    %v138 = vadd.s32 %v132, %v136
    %v139 = vadd.s32 %v133, %v136
    %v140 = vadd.s32 %v134, %v136
    %v141 = vlaneseq
    %v142 = vand.u32 %v141, 127
    %s143 = smul.u32 0, 32
    %v144 = vstv %s143
    %v145 = vadd.s32 %v142, %v144
    %vm146 = vcmp.lt.s32.totalorder %v137, 32
    %vm147 = vcmp.lt.s32.totalorder %v138, 32
    %vm148 = vcmp.lt.s32.totalorder %v139, 32
    %vm149 = vcmp.lt.s32.totalorder %v140, 32
    %vm150 = vcmp.lt.s32.totalorder %v145, 32
    %v151 = vsel %vm146, 1, 0
    %v152 = vsel %vm147, 1, 0
    %v153 = vsel %vm148, 1, 0
    %v154 = vsel %vm149, 1, 0
    %vm155 = vcmp.eq.s32.totalorder %v151, 1
    %vm156 = vcmp.eq.s32.totalorder %v152, 1
    %vm157 = vcmp.eq.s32.totalorder %v153, 1
    %vm158 = vcmp.eq.s32.totalorder %v154, 1
    %v159 = vsel %vm150, 1, 0
    %vm160 = vcmp.eq.s32.totalorder %v159, 1
    %vm161 = vmand %vm155, %vm160
    %vm162 = vmand %vm156, %vm160
    %vm163 = vmand %vm157, %vm160
    %vm164 = vmand %vm158, %vm160
    %vm165 = vcmp.ne.s32.totalorder %v137, %v145
    %vm166 = vcmp.ne.s32.totalorder %v138, %v145
    %vm167 = vcmp.ne.s32.totalorder %v139, %v145
    %vm168 = vcmp.ne.s32.totalorder %v140, %v145
    %v169 = vld [vmem:[%s2] sm:$0xff]
    %v170 = vld [vmem:[%s2 + $0x8] sm:$0xff]
    %v171 = vld [vmem:[%s2 + $0x10] sm:$0xff]
    %v172 = vld [vmem:[%s2 + $0x18] sm:$0xff]
    %v173 = vld [vmem:[%s3] sm:$0x1]
    %174 = vset.pattern.permute.xlu0 0
    %175 = vperm.xlu0 %174, %v169
    %v176 = vpop.permute.xlu0 %175
    %177 = vset.pattern.permute.xlu0 0
    %178 = vperm.xlu0 %177, %v170
    %v179 = vpop.permute.xlu0 %178
    %180 = vset.pattern.permute.xlu0 0
    %181 = vperm.xlu0 %180, %v171
    %v182 = vpop.permute.xlu0 %181
    %183 = vset.pattern.permute.xlu0 0
    %184 = vperm.xlu0 %183, %v172
    %v185 = vpop.permute.xlu0 %184
    %v186 = vlaneseq
    %v187 = vshrl.u32 %v186, 7
    %v188 = vsub.s32 0, %v187
    %v189 = vrot.slane %v173, %v188
    %vm190 = vcmp.eq.s32.totalorder %v176, %v189
    %vm191 = vcmp.eq.s32.totalorder %v179, %v189
    %vm192 = vcmp.eq.s32.totalorder %v182, %v189
    %vm193 = vcmp.eq.s32.totalorder %v185, %v189
    %vm194 = vmand %vm190, %vm165
    %vm195 = vmand %vm191, %vm166
    %vm196 = vmand %vm192, %vm167
    %vm197 = vmand %vm193, %vm168
    %vm198 = vcmp.lt.f32.partialorder %v112, 1.0
    %vm199 = vcmp.lt.f32.partialorder %v117, 1.0
    %vm200 = vcmp.lt.f32.partialorder %v122, 1.0
    %vm201 = vcmp.lt.f32.partialorder %v127, 1.0
    %vm202 = vmand %vm194, %vm198
    %vm203 = vmand %vm195, %vm199
    %vm204 = vmand %vm196, %vm200
    %vm205 = vmand %vm197, %vm201
    %vm206 = vmand %vm202, %vm161
    %vm207 = vmand %vm203, %vm162
    %vm208 = vmand %vm204, %vm163
    %vm209 = vmand %vm205, %vm164
    %vm210 = vmxor %vm190, 1
    %vm211 = vmxor %vm191, 1
    %vm212 = vmxor %vm192, 1
    %vm213 = vmxor %vm193, 1
    %vm214 = vcmp.gt.f32.partialorder %v112, 0.5
    %vm215 = vcmp.gt.f32.partialorder %v117, 0.5
    %vm216 = vcmp.gt.f32.partialorder %v122, 0.5
    %vm217 = vcmp.gt.f32.partialorder %v127, 0.5
    %vm218 = vmand %vm210, %vm214
    %vm219 = vmand %vm211, %vm215
    %vm220 = vmand %vm212, %vm216
    %vm221 = vmand %vm213, %vm217
    %vm222 = vmand %vm218, %vm161
    %vm223 = vmand %vm219, %vm162
    %vm224 = vmand %vm220, %vm163
    %vm225 = vmand %vm221, %vm164
    %v226 = vmul.f32 %v112, 2.0
    %v227 = vmul.f32 %v117, 2.0
    %v228 = vmul.f32 %v122, 2.0
    %v229 = vmul.f32 %v127, 2.0
    %v230 = vsub.f32 2.0, %v226
    %v231 = vsub.f32 2.0, %v227
    %v232 = vsub.f32 2.0, %v228
    %v233 = vsub.f32 2.0, %v229
    %v234 = vmax.f32 %v230, 0.0
    %v235 = vmax.f32 %v231, 0.0
    %v236 = vmax.f32 %v232, 0.0
    %v237 = vmax.f32 %v233, 0.0
    %v238 = vrsqrt.pop %v234
    %v239 = vmul.f32 %v234, %v238
    %vm240 = vcmp.eq.f32.partialorder %v234, inf
    %v241 = vsel %vm240, %v234, %v239
    %vm242 = vcmp.eq.f32.partialorder %v234, 0.0
    %v243 = vand.u32 %v234, 2147483648
    %v244 = vsel %vm242, %v243, %v241
    %v245 = vrsqrt.pop %v235
    %v246 = vmul.f32 %v235, %v245
    %vm247 = vcmp.eq.f32.partialorder %v235, inf
    %v248 = vsel %vm247, %v235, %v246
    %vm249 = vcmp.eq.f32.partialorder %v235, 0.0
    %v250 = vand.u32 %v235, 2147483648
    %v251 = vsel %vm249, %v250, %v248
    %v252 = vrsqrt.pop %v236
    %v253 = vmul.f32 %v236, %v252
    %vm254 = vcmp.eq.f32.partialorder %v236, inf
    %v255 = vsel %vm254, %v236, %v253
    %vm256 = vcmp.eq.f32.partialorder %v236, 0.0
    %v257 = vand.u32 %v236, 2147483648
    %v258 = vsel %vm256, %v257, %v255
    %v259 = vrsqrt.pop %v237
    %v260 = vmul.f32 %v237, %v259
    %vm261 = vcmp.eq.f32.partialorder %v237, inf
    %v262 = vsel %vm261, %v237, %v260
    %vm263 = vcmp.eq.f32.partialorder %v237, 0.0
    %v264 = vand.u32 %v237, 2147483648
    %v265 = vsel %vm263, %v264, %v262
    %v266 = vsel %vm206, %v244, 0.0
    %v267 = vsel %vm207, %v251, 0.0
    %v268 = vsel %vm208, %v258, 0.0
    %v269 = vsel %vm209, %v265, 0.0
    %vm270 = vcmask 261120
    %v271 = vsel %vm270, %v266, 0.0
    %v272 = vsel %vm270, %v267, 0.0
    %v273 = vadd.f32 %v271, %v272
    %v274 = vsel %vm270, %v268, 0.0
    %v275 = vadd.f32 %v273, %v274
    %v276 = vsel %vm270, %v269, 0.0
    %v277 = vadd.f32 %v275, %v276
    %v278 = vrot.slane %v277, 4
    %v279 = vadd.f32 %v277, %v278
    %v280 = vrot.slane %v279, 2
    %v281 = vadd.f32 %v279, %v280
    %v282 = vrot.slane %v281, 1
    %v283 = vadd.f32 %v281, %v282
    %vm284 = vcmask 253952
    %v285 = vsel %vm284, %v283, 0.0
    %286 = vadd.xlane.f32.xlu0 %v285
    %v287 = vpop.xlane.xlu0 %286
    %v288 = vrot.slane %v287, 4
    %v289 = vadd.f32 %v287, %v288
    %v290 = vrot.slane %v289, 2
    %v291 = vadd.f32 %v289, %v290
    %v292 = vrot.slane %v291, 1
    %v293 = vadd.f32 %v291, %v292
    %s294 = vtos %v293
    %v295 = vsel %vm222, %v244, 0.0
    %v296 = vsel %vm223, %v251, 0.0
    %v297 = vsel %vm224, %v258, 0.0
    %v298 = vsel %vm225, %v265, 0.0
    %v299 = vsel %vm270, %v295, 0.0
    %v300 = vsel %vm270, %v296, 0.0
    %v301 = vadd.f32 %v299, %v300
    %v302 = vsel %vm270, %v297, 0.0
    %v303 = vadd.f32 %v301, %v302
    %v304 = vsel %vm270, %v298, 0.0
    %v305 = vadd.f32 %v303, %v304
    %v306 = vrot.slane %v305, 4
    %v307 = vadd.f32 %v305, %v306
    %v308 = vrot.slane %v307, 2
    %v309 = vadd.f32 %v307, %v308
    %v310 = vrot.slane %v309, 1
    %v311 = vadd.f32 %v309, %v310
    %v312 = vsel %vm284, %v311, 0.0
    %313 = vadd.xlane.f32.xlu0 %v312
    %v314 = vpop.xlane.xlu0 %313
    %v315 = vrot.slane %v314, 4
    %v316 = vadd.f32 %v314, %v315
    %v317 = vrot.slane %v316, 2
    %v318 = vadd.f32 %v316, %v317
    %v319 = vrot.slane %v318, 1
    %v320 = vadd.f32 %v318, %v319
    %s321 = vtos %v320
    %v322 = vsel %vm206, 1, 0
    %v323 = vsel %vm207, 1, 0
    %v324 = vsel %vm208, 1, 0
    %v325 = vsel %vm209, 1, 0
    %v326 = vcvt.s32.f32 %v322
    %v327 = vcvt.s32.f32 %v323
    %v328 = vcvt.s32.f32 %v324
    %v329 = vcvt.s32.f32 %v325
    %v330 = vsel %vm270, %v326, 0.0
    %v331 = vsel %vm270, %v327, 0.0
    %v332 = vadd.f32 %v330, %v331
    %v333 = vsel %vm270, %v328, 0.0
    %v334 = vadd.f32 %v332, %v333
    %v335 = vsel %vm270, %v329, 0.0
    %v336 = vadd.f32 %v334, %v335
    %v337 = vrot.slane %v336, 4
    %v338 = vadd.f32 %v336, %v337
    %v339 = vrot.slane %v338, 2
    %v340 = vadd.f32 %v338, %v339
    %v341 = vrot.slane %v340, 1
    %v342 = vadd.f32 %v340, %v341
    %v343 = vsel %vm284, %v342, 0.0
    %344 = vadd.xlane.f32.xlu0 %v343
    %v345 = vpop.xlane.xlu0 %344
    %v346 = vrot.slane %v345, 4
    %v347 = vadd.f32 %v345, %v346
    %v348 = vrot.slane %v347, 2
    %v349 = vadd.f32 %v347, %v348
    %v350 = vrot.slane %v349, 1
    %v351 = vadd.f32 %v349, %v350
    %s352 = vtos %v351
    %v353 = vsel %vm222, 1, 0
    %v354 = vsel %vm223, 1, 0
    %v355 = vsel %vm224, 1, 0
    %v356 = vsel %vm225, 1, 0
    %v357 = vcvt.s32.f32 %v353
    %v358 = vcvt.s32.f32 %v354
    %v359 = vcvt.s32.f32 %v355
    %v360 = vcvt.s32.f32 %v356
    %v361 = vsel %vm270, %v357, 0.0
    %v362 = vsel %vm270, %v358, 0.0
    %v363 = vadd.f32 %v361, %v362
    %v364 = vsel %vm270, %v359, 0.0
    %v365 = vadd.f32 %v363, %v364
    %v366 = vsel %vm270, %v360, 0.0
    %v367 = vadd.f32 %v365, %v366
    %v368 = vrot.slane %v367, 4
    %v369 = vadd.f32 %v367, %v368
    %v370 = vrot.slane %v369, 2
    %v371 = vadd.f32 %v369, %v370
    %v372 = vrot.slane %v371, 1
    %v373 = vadd.f32 %v371, %v372
    %v374 = vsel %vm284, %v373, 0.0
    %375 = vadd.xlane.f32.xlu0 %v374
    %v376 = vpop.xlane.xlu0 %375
    %v377 = vrot.slane %v376, 4
    %v378 = vadd.f32 %v376, %v377
    %v379 = vrot.slane %v378, 2
    %v380 = vadd.f32 %v378, %v379
    %v381 = vrot.slane %v380, 1
    %v382 = vadd.f32 %v380, %v381
    %s383 = vtos %v382
    %v384 = vld [vmem:[#allocation5] sm:$0x1]
    %vm385 = vcmp.eq.s32.totalorder %v142, 0
    %v386 = vstv %s294
    %v387 = vsel %vm385, %v386, 0.0
    %vm388 = vcmp.eq.s32.totalorder %v142, 1
    %v389 = vstv %s352
    %v390 = vsel %vm388, %v389, 0.0
    %v391 = vadd.f32 %v387, %v390
    %vm392 = vcmp.eq.s32.totalorder %v142, 2
    %v393 = vstv %s321
    %v394 = vsel %vm392, %v393, 0.0
    %v395 = vadd.f32 %v391, %v394
    %vm396 = vcmp.eq.s32.totalorder %v142, 3
    %v397 = vstv %s383
    %v398 = vsel %vm396, %v397, 0.0
    %v399 = vadd.f32 %v395, %v398
    %v400 = vadd.f32 %v384, %v399
    %401 = vst [vmem:[#allocation5] sm:$0x1] %v400
    // Predicated region
    $region26: #{tpu_custom_call.1} parent=1 // pred_check
      _
    $region27: #{tpu_custom_call.1} parent=1 // pred_check_branch
      %403 = sbr.rel (0) target = $region29
    $region28: #{tpu_custom_call.1} parent=1 // pred_region
      %s405 = ssub.s32 16, 16
      %406 = vsyncadd [#allocation4], %s405
      %s408 = sshll.u32 [#allocation5], 4
      %s409 = int_to_ptr.vmem [resolvable:$true] %s408
      %411 = dma.vmem_to_hbm [thread:$0]  %s409, 16, %s4, [#allocation4]
    $region29: #{tpu_custom_call.1} parent=1 // pred_fallthru
      _
    // Predicated region
    $region30: #{tpu_custom_call.1} parent=1 // pred_check
      _
    $region31: #{tpu_custom_call.1} parent=1 // pred_check_branch
      %413 = sbr.rel (0) target = $region33
    $region32: #{tpu_custom_call.1} parent=1 // pred_region
      %414 = dma.done [#allocation4], 16
    $region33: #{tpu_custom_call.1} parent=1 // pred_fallthru
      _
    %415 = vsyncpa [#allocation3], 1
    %416 = vsyncpa [#allocation4], 1

</llo_original>
